<compile_context>
chip_gen: v5e
topology: v5e:2x2
jax: 0.10.0
libtpu: 0.0.40
codegen_flags: <defaults>
</compile_context>

<pallas_src>
import functools
import math

import jax
import jax.numpy as jnp
from jax.experimental import pallas as pl
from jax.experimental.pallas import tpu as pltpu


_PAD_LOGIT = -1e9        # pad-lane logit: never the row max, exp underflows to 0
_SUM_FLOOR = 1e-30       # clamp on the per-block softmax denominator (no NaN/-inf)


# ----------------------------------- kernel -----------------------------------


def _dqn_kernel(log,
                x_ref, w1_ref, b1_ref, w2_ref, b2_ref, w3_ref, b3_ref,
                s_ref, st_ref, out_ref):
    # fused value+advantage trunk: 3 matmuls instead of 6.
    # bf16 MXU inputs, f32 accumulation; biases / ReLU / softmax math in f32.
    xb = x_ref[...].astype(jnp.bfloat16)
    h1 = jnp.maximum(
        jnp.dot(xb, w1_ref[...], preferred_element_type=jnp.float32) + b1_ref[...], 0.0)
    h2 = jnp.maximum(
        jnp.dot(h1.astype(jnp.bfloat16), w2_ref[...],
                preferred_element_type=jnp.float32) + b2_ref[...], 0.0)
    # dueling combine already folded into w3/b3 -> q is the pre-softmax logits,
    # laid out as action-major blocks of `atoms` lanes (pad lanes pinned at -1e9).
    q = jnp.dot(h2.astype(jnp.bfloat16), w3_ref[...],
                preferred_element_type=jnp.float32) + b3_ref[...]

    # One softmax pass over the whole lane-dense row:
    #  - single per-row max shift (per-row constant -> per-block softmax invariant;
    #    pad lanes are at -1e9 so they never set the max)
    #  - one exp over the full row
    #  - per-block sums via two skinny 0/1-indicator matmuls (out_cols x A_pad)
    #  - denominator clamped so an underflowed block never yields NaN / -inf
    q = q - jnp.max(q, axis=-1, keepdims=True)
    e = jnp.exp(q)
    blk = jnp.dot(e.astype(jnp.bfloat16), s_ref[...],
                  preferred_element_type=jnp.float32)          # (TB, A_pad) block sums
    s = jnp.dot(blk.astype(jnp.bfloat16), st_ref[...],
                preferred_element_type=jnp.float32)            # broadcast back to lanes
    s = jnp.maximum(s, _SUM_FLOOR)
    if log:
        out = q - jnp.log(s)
    else:
        out = e * pl.reciprocal(s, approx=True)   # EUP vrcp, frees VALU
    out_ref[...] = out                             # full-width, lane-dense store


# ----------------------------------- wrapper -----------------------------------


def _dqn_forward_impl(x, fused_params, *, action_space, atoms, log):
    w1, b1, w2, b2, w3, b3, s_ind, st_ind = fused_params
    B, state = x.shape
    out_cols = w3.shape[1]                 # A*atoms rounded up to a multiple of 128

    # Batch tile: multiple of 16 (bf16 sublane packing).  TB=256 keeps the resident
    # bf16 weights plus double-buffered x/out blocks inside a ~48 MiB VMEM budget at
    # production shapes (v7x has 64 MiB physical VMEM).  Pass a tile-aligned batch
    # in production to take the zero-copy (no jnp.pad) path.
    tb = 256 if B >= 256 else max(16, ((B + 15) // 16) * 16)
    nb = pl.cdiv(B, tb)
    b_pad = nb * tb
    if b_pad != B:
        x = jnp.pad(x, ((0, b_pad - B), (0, 0)))

    def full_spec(a):
        # whole-array operand, constant block index -> DMA'd once, resident across
        # all batch tiles
        return pl.BlockSpec(a.shape, lambda b: (0,) * a.ndim)

    out = pl.pallas_call(
        functools.partial(_dqn_kernel, log),
        out_shape=jax.ShapeDtypeStruct((b_pad, out_cols), jnp.float32),
        grid=(nb,),
        in_specs=[pl.BlockSpec((tb, state), lambda b: (b, 0)),
                  full_spec(w1), full_spec(b1),
                  full_spec(w2), full_spec(b2),
                  full_spec(w3), full_spec(b3),
                  full_spec(s_ind), full_spec(st_ind)],
        out_specs=pl.BlockSpec((tb, out_cols), lambda b: (b, 0)),
        compiler_params=pltpu.CompilerParams(
            dimension_semantics=("parallel",),
            vmem_limit_bytes=48 * 1024 * 1024),
    )(x, w1, b1, w2, b2, w3, b3, s_ind, st_ind)

    return out[:B, :action_space * atoms].reshape(B, action_space, atoms)


dqn_forward = jax.jit(_dqn_forward_impl,
                      static_argnames=("action_space", "atoms", "log"))


# --------------------- parameter construction (NoisyLinear) ---------------------


def _scale_noise(key, n):
    z = jax.random.normal(key, (n,), jnp.float32)
    return jnp.sign(z) * jnp.sqrt(jnp.abs(z))


def noisy_linear_effective_params(key, in_f, out_f, std_init=0.4):
    """training-mode effective (W, b) of a factorised NoisyLinear layer."""
    k1, k2, k3, k4 = jax.random.split(key, 4)
    mu_range = 1.0 / math.sqrt(in_f)
    w_mu = jax.random.uniform(k1, (out_f, in_f), jnp.float32, -mu_range, mu_range)
    w_sigma = jnp.full((out_f, in_f), std_init / math.sqrt(in_f), jnp.float32)
    b_mu = jax.random.uniform(k2, (out_f,), jnp.float32, -mu_range, mu_range)
    b_sigma = jnp.full((out_f,), std_init / math.sqrt(out_f), jnp.float32)
    eps_in = _scale_noise(k3, in_f)
    eps_out = _scale_noise(k4, out_f)
    w = w_mu + w_sigma * jnp.outer(eps_out, eps_in)
    b = b_mu + b_sigma * eps_out
    return w.T, b.reshape(1, out_f)         # pre-transposed (in, out), bias (1, out)


def make_dqn_params(key, state_size, hidden1, hidden2, action_space, atoms, noisy_std=0.4):
    keys = jax.random.split(key, 6)
    layers = [
        (state_size, hidden1),              # fc_h_v
        (hidden1, hidden2),                 # fc_h1_v
        (hidden2, atoms),                   # fc_z_v
        (state_size, hidden1),              # fc_h_a
        (hidden1, hidden2),                 # fc_h1_a
        (hidden2, action_space * atoms),    # fc_z_a
    ]
    flat = []
    for k, (i, o) in zip(keys, layers):
        w, b = noisy_linear_effective_params(k, i, o, noisy_std)
        flat += [w, b]
    return tuple(flat)


def pack_fused_params(params, *, action_space, atoms):
    """Fuse v/a streams, fold the dueling combine into the last layer, pad lanes,
    build the skinny block-sum indicators, cast MXU operands to bf16."""
    (w_hv, b_hv, w_h1v, b_h1v, w_zv, b_zv,
     w_ha, b_ha, w_h1a, b_h1a, w_za, b_za) = params
    A = action_space
    hidden1 = w_hv.shape[1]
    hidden2 = w_h1v.shape[1]

    # layer 1: both streams side by side -> (state, 2*H1)
    w1 = jnp.concatenate([w_hv, w_ha], axis=1)
    b1 = jnp.concatenate([b_hv, b_ha], axis=1)

    # layer 2: block-diagonal -> (2*H1, 2*H2)
    z12 = jnp.zeros((hidden1, hidden2), jnp.float32)
    w2 = jnp.block([[w_h1v, z12], [z12, w_h1a]])
    b2 = jnp.concatenate([b_h1v, b_h1a], axis=1)

    # layer 3 with the dueling combine folded in:
    #   q[:, j*atoms+t] = v[:, t] + a[:, j*atoms+t] - (1/A) * sum_k a[:, k*atoms+t]
    w_za_b = w_za.reshape(hidden2, A, atoms)
    w_za_c = (w_za_b - w_za_b.mean(axis=1, keepdims=True)).reshape(hidden2, A * atoms)
    b_za_b = b_za.reshape(1, A, atoms)
    b_za_c = (b_za_b - b_za_b.mean(axis=1, keepdims=True)).reshape(1, A * atoms)
    w_zv_t = jnp.tile(w_zv, (1, A))                      # v columns repeated per action
    b_zv_t = jnp.tile(b_zv, (1, A))
    w3 = jnp.concatenate([w_zv_t, w_za_c], axis=0)       # (2*H2, A*atoms)
    b3 = b_zv_t + b_za_c
    # TODO(synk): at large A, computing the value head as a separate (B,2H2)x(2H2,atoms)
    # matmul would remove the (A-1)*H2*atoms redundant MACs of the tile; only worth it
    # if layer 3 ever becomes the binding matmul.

    # lane-pad the output dimension to a multiple of 128; pad-lane biases are pinned
    # far below any real logit so they never set the row-wide softmax max.
    n_real = A * atoms
    out_cols = ((n_real + 127) // 128) * 128
    pad = out_cols - n_real
    if pad:
        w3 = jnp.pad(w3, ((0, 0), (0, pad)))
        b3 = jnp.pad(b3, ((0, 0), (0, pad)), constant_values=_PAD_LOGIT)

    # skinny block-sum indicators (replace the dense out_cols^2 ones-block matrix):
    # S[c, block_id(c)] = 1; real lane c belongs to action block c // atoms, all pad
    # lanes share one extra block (their exp is 0, their sum is handled by the clamp).
    col = jnp.arange(out_cols)
    block_id = jnp.where(col < n_real, col // atoms, A)
    n_blk = A + (1 if pad else 0)
    a_pad = ((n_blk + 127) // 128) * 128
    s_ind = (block_id[:, None] == jnp.arange(a_pad)[None, :]).astype(jnp.bfloat16)
    st_ind = jnp.asarray(s_ind.T)

    # bf16 MXU operands (exact for the 0/1 indicators); biases stay f32.
    # TODO(synk): on v7x, w1 (the dominant state x 2*H1 matmul) could go fp8 with
    # per-channel scales for another ~2x MXU rate.
    bf16 = jnp.bfloat16
    return (w1.astype(bf16), b1, w2.astype(bf16), b2, w3.astype(bf16), b3,
            s_ind, st_ind)


# --------------------------------- reference ----------------------------------


def dqn_reference(x, params, *, action_space, atoms, log=False):
    (w_hv, b_hv, w_h1v, b_h1v, w_zv, b_zv,
     w_ha, b_ha, w_h1a, b_h1a, w_za, b_za) = params

    def lin(h, w, b):
        return h @ w + b

    v = lin(jax.nn.relu(lin(jax.nn.relu(lin(x, w_hv, b_hv)), w_h1v, b_h1v)), w_zv, b_zv)
    a = lin(jax.nn.relu(lin(jax.nn.relu(lin(x, w_ha, b_ha)), w_h1a, b_h1a)), w_za, b_za)
    v = v.reshape(-1, 1, atoms)
    a = a.reshape(-1, action_space, atoms)
    q = v + a - a.mean(axis=1, keepdims=True)
    return jax.nn.log_softmax(q, axis=2) if log else jax.nn.softmax(q, axis=2)


# ------------------------------------ main -------------------------------------


if __name__ == "__main__":
    # small, module-consistent shapes
    B, STATE, H1, H2, ACTIONS, ATOMS = 2, 8, 32, 32, 4, 8

    key = jax.random.PRNGKey(0)
    kx, kp = jax.random.split(key)
    x = jax.random.normal(kx, (B, STATE), jnp.float32)

    raw_params = make_dqn_params(kp, STATE, H1, H2, ACTIONS, ATOMS, noisy_std=0.4)
    fused_params = jax.tree_util.tree_map(
        jax.block_until_ready,
        pack_fused_params(raw_params, action_space=ACTIONS, atoms=ATOMS))

    # Tolerances are looser than the pure-f32 version because the kernel now feeds
    # the MXU bf16 operands (f32 accumulation); the f32 PyTorch-equivalent reference
    # is the comparison baseline.
    TOL = 3e-2

    # softmax path
    q = dqn_forward(x, fused_params, action_space=ACTIONS, atoms=ATOMS, log=False)
    q = jax.block_until_ready(q)
    q_ref = dqn_reference(x, raw_params, action_space=ACTIONS, atoms=ATOMS, log=False)
    assert q.shape == (B, ACTIONS, ATOMS)
    assert bool(jnp.all(jnp.isfinite(q)))
    assert jnp.allclose(jnp.sum(q, axis=-1), 1.0, atol=2e-2)
    assert jnp.allclose(q, q_ref, rtol=TOL, atol=TOL)

    # log-softmax path
    lq = dqn_forward(x, fused_params, action_space=ACTIONS, atoms=ATOMS, log=True)
    lq = jax.block_until_ready(lq)
    lq_ref = dqn_reference(x, raw_params, action_space=ACTIONS, atoms=ATOMS, log=True)
    assert bool(jnp.all(jnp.isfinite(lq)))
    assert jnp.allclose(lq, lq_ref, rtol=TOL, atol=TOL)

    print("KERNEL_OK")
</pallas_src>

<mosaic_0001>
module attributes {stable_mosaic.version = 11 : i64} {
  func.func @_dqn_kernel(%arg0: i32, %arg1: memref<16x8xf32, #tpu.memory_space<vmem>>, %arg2: memref<8x64xbf16, #tpu.memory_space<vmem>>, %arg3: memref<1x64xf32, #tpu.memory_space<vmem>>, %arg4: memref<64x64xbf16, #tpu.memory_space<vmem>>, %arg5: memref<1x64xf32, #tpu.memory_space<vmem>>, %arg6: memref<64x128xbf16, #tpu.memory_space<vmem>>, %arg7: memref<1x128xf32, #tpu.memory_space<vmem>>, %arg8: memref<128x128xbf16, #tpu.memory_space<vmem>>, %arg9: memref<128x128xbf16, #tpu.memory_space<vmem>>, %arg10: memref<16x128xf32, #tpu.memory_space<vmem>>) attributes {dimension_semantics = [#tpu.dimension_semantics<parallel>], iteration_bounds = array<i64: 1>, scalar_prefetch = 0 : i64, scratch_operands = 0 : i64, tpu.core_type = #tpu.core_type<tc>, window_params = [{transform_indices = @transform_0, window_bounds = array<i64: 16, 8>}, {pipeline_mode = #tpu.pipeline_mode<synchronous>, transform_indices = @transform_1, window_bounds = array<i64: 8, 64>}, {pipeline_mode = #tpu.pipeline_mode<synchronous>, transform_indices = @transform_2, window_bounds = array<i64: 1, 64>}, {pipeline_mode = #tpu.pipeline_mode<synchronous>, transform_indices = @transform_3, window_bounds = array<i64: 64, 64>}, {pipeline_mode = #tpu.pipeline_mode<synchronous>, transform_indices = @transform_4, window_bounds = array<i64: 1, 64>}, {pipeline_mode = #tpu.pipeline_mode<synchronous>, transform_indices = @transform_5, window_bounds = array<i64: 64, 128>}, {pipeline_mode = #tpu.pipeline_mode<synchronous>, transform_indices = @transform_6, window_bounds = array<i64: 1, 128>}, {pipeline_mode = #tpu.pipeline_mode<synchronous>, transform_indices = @transform_7, window_bounds = array<i64: 128, 128>}, {pipeline_mode = #tpu.pipeline_mode<synchronous>, transform_indices = @transform_8, window_bounds = array<i64: 128, 128>}, {transform_indices = @transform_9, window_bounds = array<i64: 16, 128>}]} {
    %c0 = arith.constant 0 : index
    %c0_0 = arith.constant 0 : index
    %0 = vector.load %arg1[%c0, %c0_0] : memref<16x8xf32, #tpu.memory_space<vmem>>, vector<16x8xf32>
    %1 = arith.truncf %0 : vector<16x8xf32> to vector<16x8xbf16>
    %c0_1 = arith.constant 0 : index
    %c0_2 = arith.constant 0 : index
    %2 = vector.load %arg2[%c0_1, %c0_2] : memref<8x64xbf16, #tpu.memory_space<vmem>>, vector<8x64xbf16>
    %cst = arith.constant dense<0.000000e+00> : vector<16x64xf32>
    %3 = tpu.matmul %1, %2, %cst {dimension_numbers = #tpu.dot_dimension_numbers<[1], [0], [0], [1], [0, 0, 1, 1], [], []>} : vector<16x8xbf16>, vector<8x64xbf16>, vector<16x64xf32> -> vector<16x64xf32>
    %c0_3 = arith.constant 0 : index
    %c0_4 = arith.constant 0 : index
    %4 = vector.load %arg3[%c0_3, %c0_4] : memref<1x64xf32, #tpu.memory_space<vmem>>, vector<1x64xf32>
    %5 = vector.broadcast %4 : vector<1x64xf32> to vector<16x64xf32>
    %6 = arith.addf %3, %5 : vector<16x64xf32>
    %cst_5 = arith.constant 0.000000e+00 : f32
    %7 = vector.broadcast %cst_5 : f32 to vector<16x64xf32>
    %8 = arith.maximumf %6, %7 : vector<16x64xf32>
    %9 = arith.truncf %8 : vector<16x64xf32> to vector<16x64xbf16>
    %c0_6 = arith.constant 0 : index
    %c0_7 = arith.constant 0 : index
    %10 = vector.load %arg4[%c0_6, %c0_7] : memref<64x64xbf16, #tpu.memory_space<vmem>>, vector<64x64xbf16>
    %cst_8 = arith.constant dense<0.000000e+00> : vector<16x64xf32>
    %11 = tpu.matmul %9, %10, %cst_8 {dimension_numbers = #tpu.dot_dimension_numbers<[1], [0], [0], [1], [0, 0, 1, 1], [], []>} : vector<16x64xbf16>, vector<64x64xbf16>, vector<16x64xf32> -> vector<16x64xf32>
    %c0_9 = arith.constant 0 : index
    %c0_10 = arith.constant 0 : index
    %12 = vector.load %arg5[%c0_9, %c0_10] : memref<1x64xf32, #tpu.memory_space<vmem>>, vector<1x64xf32>
    %13 = vector.broadcast %12 : vector<1x64xf32> to vector<16x64xf32>
    %14 = arith.addf %11, %13 : vector<16x64xf32>
    %cst_11 = arith.constant 0.000000e+00 : f32
    %15 = vector.broadcast %cst_11 : f32 to vector<16x64xf32>
    %16 = arith.maximumf %14, %15 : vector<16x64xf32>
    %17 = arith.truncf %16 : vector<16x64xf32> to vector<16x64xbf16>
    %c0_12 = arith.constant 0 : index
    %c0_13 = arith.constant 0 : index
    %18 = vector.load %arg6[%c0_12, %c0_13] : memref<64x128xbf16, #tpu.memory_space<vmem>>, vector<64x128xbf16>
    %cst_14 = arith.constant dense<0.000000e+00> : vector<16x128xf32>
    %19 = tpu.matmul %17, %18, %cst_14 {dimension_numbers = #tpu.dot_dimension_numbers<[1], [0], [0], [1], [0, 0, 1, 1], [], []>} : vector<16x64xbf16>, vector<64x128xbf16>, vector<16x128xf32> -> vector<16x128xf32>
    %c0_15 = arith.constant 0 : index
    %c0_16 = arith.constant 0 : index
    %20 = vector.load %arg7[%c0_15, %c0_16] : memref<1x128xf32, #tpu.memory_space<vmem>>, vector<1x128xf32>
    %21 = vector.broadcast %20 : vector<1x128xf32> to vector<16x128xf32>
    %22 = arith.addf %19, %21 : vector<16x128xf32>
    %cst_17 = arith.constant dense<0xFF800000> : vector<16xf32>
    %23 = vector.multi_reduction <maximumf>, %22, %cst_17 [1] : vector<16x128xf32> to vector<16xf32>
    %24 = vector.shape_cast %23 : vector<16xf32> to vector<16x1xf32>
    %25 = vector.broadcast %24 : vector<16x1xf32> to vector<16x128xf32>
    %26 = arith.subf %22, %25 : vector<16x128xf32>
    %27 = math.exp %26 : vector<16x128xf32>
    %28 = arith.truncf %27 : vector<16x128xf32> to vector<16x128xbf16>
    %c0_18 = arith.constant 0 : index
    %c0_19 = arith.constant 0 : index
    %29 = vector.load %arg8[%c0_18, %c0_19] : memref<128x128xbf16, #tpu.memory_space<vmem>>, vector<128x128xbf16>
    %cst_20 = arith.constant dense<0.000000e+00> : vector<16x128xf32>
    %30 = tpu.matmul %28, %29, %cst_20 {dimension_numbers = #tpu.dot_dimension_numbers<[1], [0], [0], [1], [0, 0, 1, 1], [], []>} : vector<16x128xbf16>, vector<128x128xbf16>, vector<16x128xf32> -> vector<16x128xf32>
    %31 = arith.truncf %30 : vector<16x128xf32> to vector<16x128xbf16>
    %c0_21 = arith.constant 0 : index
    %c0_22 = arith.constant 0 : index
    %32 = vector.load %arg9[%c0_21, %c0_22] : memref<128x128xbf16, #tpu.memory_space<vmem>>, vector<128x128xbf16>
    %cst_23 = arith.constant dense<0.000000e+00> : vector<16x128xf32>
    %33 = tpu.matmul %31, %32, %cst_23 {dimension_numbers = #tpu.dot_dimension_numbers<[1], [0], [0], [1], [0, 0, 1, 1], [], []>} : vector<16x128xbf16>, vector<128x128xbf16>, vector<16x128xf32> -> vector<16x128xf32>
    %cst_24 = arith.constant 1.000000e-30 : f32
    %34 = vector.broadcast %cst_24 : f32 to vector<16x128xf32>
    %35 = arith.maximumf %33, %34 : vector<16x128xf32>
    %36 = tpu.reciprocal %35 {approx = true} : vector<16x128xf32> -> vector<16x128xf32>
    %37 = arith.mulf %27, %36 : vector<16x128xf32>
    %c0_25 = arith.constant 0 : index
    %c0_26 = arith.constant 0 : index
    %38 = vector.load %arg10[%c0_25, %c0_26] : memref<16x128xf32, #tpu.memory_space<vmem>>, vector<16x128xf32>
    tpu.vector_store %arg10[%c0_25, %c0_26], %37 {strides = array<i32>} : memref<16x128xf32, #tpu.memory_space<vmem>>, vector<16x128xf32>,
    return
  }
  func.func @transform_0(%arg0: i32) -> (i32, i32) {
    %c0_i32 = arith.constant 0 : i32
    %c0_i32_0 = arith.constant 0 : i32
    return %arg0, %c0_i32 : i32, i32
  }
  func.func @transform_1(%arg0: i32) -> (i32, i32) {
    %c0_i32 = arith.constant 0 : i32
    %c0_i32_0 = arith.constant 0 : i32
    %c0_i32_1 = arith.constant 0 : i32
    return %c0_i32, %c0_i32_0 : i32, i32
  }
  func.func @transform_2(%arg0: i32) -> (i32, i32) {
    %c0_i32 = arith.constant 0 : i32
    %c0_i32_0 = arith.constant 0 : i32
    %c0_i32_1 = arith.constant 0 : i32
    return %c0_i32, %c0_i32_0 : i32, i32
  }
  func.func @transform_3(%arg0: i32) -> (i32, i32) {
    %c0_i32 = arith.constant 0 : i32
    %c0_i32_0 = arith.constant 0 : i32
    %c0_i32_1 = arith.constant 0 : i32
    return %c0_i32, %c0_i32_0 : i32, i32
  }
  func.func @transform_4(%arg0: i32) -> (i32, i32) {
    %c0_i32 = arith.constant 0 : i32
    %c0_i32_0 = arith.constant 0 : i32
    %c0_i32_1 = arith.constant 0 : i32
    return %c0_i32, %c0_i32_0 : i32, i32
  }
  func.func @transform_5(%arg0: i32) -> (i32, i32) {
    %c0_i32 = arith.constant 0 : i32
    %c0_i32_0 = arith.constant 0 : i32
    %c0_i32_1 = arith.constant 0 : i32
    return %c0_i32, %c0_i32_0 : i32, i32
  }
  func.func @transform_6(%arg0: i32) -> (i32, i32) {
    %c0_i32 = arith.constant 0 : i32
    %c0_i32_0 = arith.constant 0 : i32
    %c0_i32_1 = arith.constant 0 : i32
    return %c0_i32, %c0_i32_0 : i32, i32
  }
  func.func @transform_7(%arg0: i32) -> (i32, i32) {
    %c0_i32 = arith.constant 0 : i32
    %c0_i32_0 = arith.constant 0 : i32
    %c0_i32_1 = arith.constant 0 : i32
    return %c0_i32, %c0_i32_0 : i32, i32
  }
  func.func @transform_8(%arg0: i32) -> (i32, i32) {
    %c0_i32 = arith.constant 0 : i32
    %c0_i32_0 = arith.constant 0 : i32
    %c0_i32_1 = arith.constant 0 : i32
    return %c0_i32, %c0_i32_0 : i32, i32
  }
  func.func @transform_9(%arg0: i32) -> (i32, i32) {
    %c0_i32 = arith.constant 0 : i32
    %c0_i32_0 = arith.constant 0 : i32
    return %arg0, %c0_i32 : i32, i32
  }
}

</mosaic_0001>

<llo_original>
// kernel: _dqn_forward_impl.1
$region0: #{_dqn_forward_impl.1}
  #allocation0 [shape = 'u32[]', space=smem, size = 0x4, offset = 0x4, fixed_abs, tag = 'smem constant byte address 0x4 - core index']
  #allocation1 [shape = 'u32[72,128]{1,0:T(1,128)}', space=vmem, size = 0x9000, scoped, tag = 'internal scratch']
  %s0 = inlined_call_operand.vmem [shape: f32[16,8], index: 0, kind: input, shape index: {}]
  %s1 = inlined_call_operand.vmem [shape: bf16[8,64], index: 1, kind: input, shape index: {}]
  %s2 = inlined_call_operand.vmem [shape: f32[1,64], index: 2, kind: input, shape index: {}]
  %s3 = inlined_call_operand.hbm [shape: bf16[64,64], index: 3, kind: input, shape index: {}]
  %s4 = inlined_call_operand.vmem [shape: f32[1,64], index: 4, kind: input, shape index: {}]
  %s5 = inlined_call_operand.hbm [shape: bf16[64,128], index: 5, kind: input, shape index: {}]
  %s6 = inlined_call_operand.vmem [shape: f32[1,128], index: 6, kind: input, shape index: {}]
  %s7 = inlined_call_operand.hbm [shape: bf16[128,128], index: 7, kind: input, shape index: {}]
  %s8 = inlined_call_operand.hbm [shape: bf16[128,128], index: 8, kind: input, shape index: {}]
  %s9 = inlined_call_operand.vmem [shape: f32[16,128], index: 9, kind: output, shape index: {}]
  %s10 = sld [smem:[#allocation0]]
  $region62: #{_dqn_forward_impl.1} parent=0
    _
  %s12 = ssub.s32 1, %s10
  %s13 = scalar_select 0, %s12, %s10
  $region1: #{_dqn_forward_impl.1} parent=0
    #allocation2 [shape = 'u8[16384]{0}', space=vmem, size = 0x4000, scoped, tag = 'input window, operand 3, single buffered']
    #allocation3 [shape = 's32[1]{0}', space=sflag, size = 0x4, scoped, tag = 'scoped memory for _dqn_forward_impl.1']
    #allocation4 [shape = 'u8[16384]{0}', space=vmem, size = 0x4000, scoped, tag = 'input window, operand 5, single buffered']
    #allocation5 [shape = 's32[1]{0}', space=sflag, size = 0x4, scoped, tag = 'scoped memory for _dqn_forward_impl.1']
    #allocation6 [shape = 'u8[32768]{0}', space=vmem, size = 0x8000, scoped, tag = 'input window, operand 7, single buffered']
    #allocation7 [shape = 'u8[32768]{0}', space=vmem, size = 0x8000, scoped, tag = 'input window, operand 8, single buffered']
    #allocation8 [shape = 's32[1]{0}', space=sflag, size = 0x4, scoped, tag = 'scoped memory for _dqn_forward_impl.1']
    %14 = vsyncpa [#allocation3], 0
    %15 = vsyncpa [#allocation5], 0
    %16 = vsyncpa [#allocation8], 0
    // Predicated region
    $region2: #{_dqn_forward_impl.1} parent=1 // pred_check
      _
    $region3: #{_dqn_forward_impl.1} parent=1 // pred_check_branch
      %18 = sbr.rel (0) target = $region5
    $region4: #{_dqn_forward_impl.1} parent=1 // pred_region
      _
    $region5: #{_dqn_forward_impl.1} parent=1 // pred_fallthru
      _
    // Predicated region
    $region6: #{_dqn_forward_impl.1} parent=1 // pred_check
      _
    $region7: #{_dqn_forward_impl.1} parent=1 // pred_check_branch
      %20 = sbr.rel (0) target = $region9
    $region8: #{_dqn_forward_impl.1} parent=1 // pred_region
      _
    $region9: #{_dqn_forward_impl.1} parent=1 // pred_fallthru
      _
    // Predicated region
    $region10: #{_dqn_forward_impl.1} parent=1 // pred_check
      _
    $region11: #{_dqn_forward_impl.1} parent=1 // pred_check_branch
      %22 = sbr.rel (0) target = $region13
    $region12: #{_dqn_forward_impl.1} parent=1 // pred_region
      _
    $region13: #{_dqn_forward_impl.1} parent=1 // pred_fallthru
      _
    // Predicated region
    $region14: #{_dqn_forward_impl.1} parent=1 // pred_check
      _
    $region15: #{_dqn_forward_impl.1} parent=1 // pred_check_branch
      %24 = sbr.rel (0) target = $region17
    $region16: #{_dqn_forward_impl.1} parent=1 // pred_region
      %26 = vsyncadd [#allocation3], 0
      %s27 = sshll.u32 %s3, 4
      %s28 = int_to_ptr.hbm [resolvable:$true] %s27
      %s29 = sshll.u32 [#allocation2], 4
      %s30 = int_to_ptr.vmem [resolvable:$true] %s29
      %35 = dma.hbm_to_vmem [thread:$0]  %s28, 512, %s30, [#allocation3], 64, 64, 4
    $region17: #{_dqn_forward_impl.1} parent=1 // pred_fallthru
      _
    // Predicated region
    $region18: #{_dqn_forward_impl.1} parent=1 // pred_check
      _
    $region19: #{_dqn_forward_impl.1} parent=1 // pred_check_branch
      %37 = sbr.rel (0) target = $region21
    $region20: #{_dqn_forward_impl.1} parent=1 // pred_region
      _
    $region21: #{_dqn_forward_impl.1} parent=1 // pred_fallthru
      _
    // Predicated region
    $region22: #{_dqn_forward_impl.1} parent=1 // pred_check
      _
    $region23: #{_dqn_forward_impl.1} parent=1 // pred_check_branch
      %39 = sbr.rel (0) target = $region25
    $region24: #{_dqn_forward_impl.1} parent=1 // pred_region
      %41 = vsyncadd [#allocation5], 0
      %s42 = sshll.u32 %s5, 4
      %s43 = int_to_ptr.hbm [resolvable:$true] %s42
      %s44 = sshll.u32 [#allocation4], 4
      %s45 = int_to_ptr.vmem [resolvable:$true] %s44
      %50 = dma.hbm_to_vmem [thread:$0]  %s43, 512, %s45, [#allocation5], 64, 64, 4
    $region25: #{_dqn_forward_impl.1} parent=1 // pred_fallthru
      _
    // Predicated region
    $region26: #{_dqn_forward_impl.1} parent=1 // pred_check
      _
    $region27: #{_dqn_forward_impl.1} parent=1 // pred_check_branch
      %52 = sbr.rel (0) target = $region29
    $region28: #{_dqn_forward_impl.1} parent=1 // pred_region
      _
    $region29: #{_dqn_forward_impl.1} parent=1 // pred_fallthru
      _
    // Predicated region
    $region30: #{_dqn_forward_impl.1} parent=1 // pred_check
      _
    $region31: #{_dqn_forward_impl.1} parent=1 // pred_check_branch
      %54 = sbr.rel (0) target = $region33
    $region32: #{_dqn_forward_impl.1} parent=1 // pred_region
      %56 = vsyncadd [#allocation5], 0
      %s57 = sshll.u32 %s7, 4
      %s58 = int_to_ptr.hbm [resolvable:$true] %s57
      %s59 = sshll.u32 [#allocation6], 4
      %s60 = int_to_ptr.vmem [resolvable:$true] %s59
      %65 = dma.hbm_to_vmem [thread:$0]  %s58, 1024, %s60, [#allocation5], 64, 64, 4
    $region33: #{_dqn_forward_impl.1} parent=1 // pred_fallthru
      _
    // Predicated region
    $region34: #{_dqn_forward_impl.1} parent=1 // pred_check
      _
    $region35: #{_dqn_forward_impl.1} parent=1 // pred_check_branch
      %67 = sbr.rel (0) target = $region37
    $region36: #{_dqn_forward_impl.1} parent=1 // pred_region
      %69 = vsyncadd [#allocation8], 0
      %s70 = sshll.u32 %s8, 4
      %s71 = int_to_ptr.hbm [resolvable:$true] %s70
      %s72 = sshll.u32 [#allocation7], 4
      %s73 = int_to_ptr.vmem [resolvable:$true] %s72
      %78 = dma.hbm_to_vmem [thread:$0]  %s71, 1024, %s73, [#allocation8], 64, 64, 4
    $region37: #{_dqn_forward_impl.1} parent=1 // pred_fallthru
      _
    // Predicated region
    $region38: #{_dqn_forward_impl.1} parent=1 // pred_check
      _
    $region39: #{_dqn_forward_impl.1} parent=1 // pred_check_branch
      %80 = sbr.rel (0) target = $region41
    $region40: #{_dqn_forward_impl.1} parent=1 // pred_region
      %82 = dma.done [#allocation3], 512
    $region41: #{_dqn_forward_impl.1} parent=1 // pred_fallthru
      _
    // Predicated region
    $region42: #{_dqn_forward_impl.1} parent=1 // pred_check
      _
    $region43: #{_dqn_forward_impl.1} parent=1 // pred_check_branch
      %84 = sbr.rel (0) target = $region45
    $region44: #{_dqn_forward_impl.1} parent=1 // pred_region
      %86 = dma.done [#allocation5], 512
    $region45: #{_dqn_forward_impl.1} parent=1 // pred_fallthru
      _
    // Predicated region
    $region46: #{_dqn_forward_impl.1} parent=1 // pred_check
      _
    $region47: #{_dqn_forward_impl.1} parent=1 // pred_check_branch
      %88 = sbr.rel (0) target = $region49
    $region48: #{_dqn_forward_impl.1} parent=1 // pred_region
      %90 = dma.done [#allocation5], 1024
    $region49: #{_dqn_forward_impl.1} parent=1 // pred_fallthru
      _
    // Predicated region
    $region50: #{_dqn_forward_impl.1} parent=1 // pred_check
      _
    $region51: #{_dqn_forward_impl.1} parent=1 // pred_check_branch
      %92 = sbr.rel (0) target = $region53
    $region52: #{_dqn_forward_impl.1} parent=1 // pred_region
      %94 = dma.done [#allocation8], 1024
    $region53: #{_dqn_forward_impl.1} parent=1 // pred_fallthru
      _
    %v96 = vld [vmem:[%s0] sm:$0xff]
    %v97 = vld [vmem:[%s0 + $0x8] sm:$0xff]
    %v98 = vpack.c.bf16 %v97, %v96
    %v99 = vld [vmem:[%s1] sm:$0xf]
    %v100 = vld [vmem:[%s2] sm:$0x1]
    %v102 = vperm.slane %v100, 0
    %vm104 = vcmask 64512
    %v106 = vsel %vm104, %v98, 0
    %vm108 = vcmask 1043456
    %v110 = vsel %vm108, %v99, 0
    %112 = vmatpush.bf16.msra.mxu0 0
    %113 = vmatpush.bf16.msra.mxu0 0
    %114 = vmatpush.bf16.msra.mxu0 0
    %115 = vmatpush.bf16.msra.mxu0 0
    %116 = vmatpush.bf16.msra.mxu0 0
    %117 = vmatpush.bf16.msra.mxu0 0
    %118 = vmatpush.bf16.msra.mxu0 0
    %119 = vmatpush.bf16.msra.mxu0 %v110
    %120 = vmatmul.bf16.gmra.mxu0 %v106
    %v121 = vpop.f32.mrf.mxu0
    %v122 = vadd.f32 %v102, %v121
    %v123 = vpop.f32.mrf.mxu0
    %v124 = vadd.f32 %v102, %v123
    %125 = vdwg.mxu0
    %v126 = vmax.f32 %v122, 0.0
    %v127 = vmax.f32 %v124, 0.0
    %v128 = vpack.c.bf16 %v127, %v126
    %v129 = vld [vmem:[#allocation2] sm:$0xf]
    %v130 = vld [vmem:[#allocation2 + $0x4] sm:$0xf]
    %v131 = vld [vmem:[#allocation2 + $0x8] sm:$0xf]
    %v132 = vld [vmem:[#allocation2 + $0xc] sm:$0xf]
    %v133 = vld [vmem:[#allocation2 + $0x10] sm:$0xf]
    %v134 = vld [vmem:[#allocation2 + $0x14] sm:$0xf]
    %v135 = vld [vmem:[#allocation2 + $0x18] sm:$0xf]
    %v136 = vld [vmem:[#allocation2 + $0x1c] sm:$0xf]
    %v137 = vld [vmem:[%s4] sm:$0x1]
    %v139 = vperm.slane %v137, 0
    %v149 = vunpack.c.l.b16 %v129
    %v150 = vunpack.c.l.b16 %v130
    %v151 = vunpack.c.l.b16 %v131
    %v152 = vunpack.c.l.b16 %v132
    %v153 = vunpack.c.l.b16 %v133
    %v154 = vunpack.c.l.b16 %v134
    %v155 = vunpack.c.l.b16 %v135
    %v156 = vunpack.c.l.b16 %v136
    %v157 = vpack.c.b16 %v150, %v149
    %v158 = vpack.c.b16 %v152, %v151
    %v159 = vpack.c.b16 %v154, %v153
    %v160 = vpack.c.b16 %v156, %v155
    %vm165 = vcmask 523264
    %v167 = vsel %vm165, %v128, 0
    %169 = vmatpush.bf16.msra.mxu0 0
    %170 = vmatpush.bf16.msra.mxu0 0
    %171 = vmatpush.bf16.msra.mxu0 0
    %172 = vmatpush.bf16.msra.mxu0 0
    %173 = vmatpush.bf16.msra.mxu0 %v160
    %174 = vmatpush.bf16.msra.mxu0 %v159
    %175 = vmatpush.bf16.msra.mxu0 %v158
    %176 = vmatpush.bf16.msra.mxu0 %v157
    %177 = vmatmul.bf16.gmra.mxu0 %v167
    %v178 = vpop.f32.mrf.mxu0
    %v179 = vadd.f32 %v139, %v178
    %v180 = vpop.f32.mrf.mxu0
    %v181 = vadd.f32 %v139, %v180
    %182 = vdwg.mxu0
    %v183 = vmax.f32 %v179, 0.0
    %v184 = vmax.f32 %v181, 0.0
    %v185 = vpack.c.bf16 %v184, %v183
    %v186 = vld [vmem:[#allocation4] sm:$0xf]
    %v187 = vld [vmem:[#allocation4 + $0x4] sm:$0xf]
    %v188 = vld [vmem:[#allocation4 + $0x8] sm:$0xf]
    %v189 = vld [vmem:[#allocation4 + $0xc] sm:$0xf]
    %v190 = vld [vmem:[#allocation4 + $0x10] sm:$0xf]
    %v191 = vld [vmem:[#allocation4 + $0x14] sm:$0xf]
    %v192 = vld [vmem:[#allocation4 + $0x18] sm:$0xf]
    %v193 = vld [vmem:[#allocation4 + $0x1c] sm:$0xf]
    %v194 = vld [vmem:[%s6] sm:$0x1]
    %v196 = vperm.slane %v194, 0
    %v206 = vunpack.c.l.b16 %v186
    %v207 = vunpack.c.l.b16 %v187
    %v208 = vunpack.c.l.b16 %v188
    %v209 = vunpack.c.l.b16 %v189
    %v210 = vunpack.c.l.b16 %v190
    %v211 = vunpack.c.l.b16 %v191
    %v212 = vunpack.c.l.b16 %v192
    %v213 = vunpack.c.l.b16 %v193
    %v214 = vpack.c.b16 %v207, %v206
    %v215 = vpack.c.b16 %v209, %v208
    %v216 = vpack.c.b16 %v211, %v210
    %v217 = vpack.c.b16 %v213, %v212
    %v223 = vsel %vm165, %v185, 0
    %225 = vmatpush.bf16.msra.mxu0 0
    %226 = vmatpush.bf16.msra.mxu0 0
    %227 = vmatpush.bf16.msra.mxu0 0
    %228 = vmatpush.bf16.msra.mxu0 0
    %229 = vmatpush.bf16.msra.mxu0 %v217
    %230 = vmatpush.bf16.msra.mxu0 %v216
    %231 = vmatpush.bf16.msra.mxu0 %v215
    %232 = vmatpush.bf16.msra.mxu0 %v214
    %233 = vmatmul.bf16.gmra.mxu0 %v223
    %v234 = vpop.f32.mrf.mxu0
    %v235 = vadd.f32 %v196, %v234
    %v236 = vpop.f32.mrf.mxu0
    %v237 = vadd.f32 %v196, %v236
    %238 = vdwg.mxu0
    %239 = vmax.xlane.f32.xlu0 %v235
    %v240 = vpop.xlane.xlu0 %239
    %241 = vmax.xlane.f32.xlu0 %v237
    %v242 = vpop.xlane.xlu0 %241
    %v243 = vsub.f32 %v235, %v240
    %v244 = vsub.f32 %v237, %v242
    %v245 = vmul.f32 %v243, 1.442695
    %v246 = vpow.pop %v245
    %v247 = vmul.f32 %v244, 1.442695
    %v248 = vpow.pop %v247
    %v249 = vpack.c.bf16 %v248, %v246
    %v250 = vld [vmem:[#allocation6] sm:$0xf]
    %v251 = vld [vmem:[#allocation6 + $0x4] sm:$0xf]
    %v252 = vld [vmem:[#allocation6 + $0x8] sm:$0xf]
    %v253 = vld [vmem:[#allocation6 + $0xc] sm:$0xf]
    %v254 = vld [vmem:[#allocation6 + $0x10] sm:$0xf]
    %v255 = vld [vmem:[#allocation6 + $0x14] sm:$0xf]
    %v256 = vld [vmem:[#allocation6 + $0x18] sm:$0xf]
    %v257 = vld [vmem:[#allocation6 + $0x1c] sm:$0xf]
    %v258 = vld [vmem:[#allocation6 + $0x20] sm:$0xf]
    %v259 = vld [vmem:[#allocation6 + $0x24] sm:$0xf]
    %v260 = vld [vmem:[#allocation6 + $0x28] sm:$0xf]
    %v261 = vld [vmem:[#allocation6 + $0x2c] sm:$0xf]
    %v262 = vld [vmem:[#allocation6 + $0x30] sm:$0xf]
    %v263 = vld [vmem:[#allocation6 + $0x34] sm:$0xf]
    %v264 = vld [vmem:[#allocation6 + $0x38] sm:$0xf]
    %v265 = vld [vmem:[#allocation6 + $0x3c] sm:$0xf]
    %v282 = vunpack.c.l.b16 %v250
    %v283 = vunpack.c.l.b16 %v251
    %v284 = vunpack.c.l.b16 %v252
    %v285 = vunpack.c.l.b16 %v253
    %v286 = vunpack.c.l.b16 %v254
    %v287 = vunpack.c.l.b16 %v255
    %v288 = vunpack.c.l.b16 %v256
    %v289 = vunpack.c.l.b16 %v257
    %v290 = vunpack.c.l.b16 %v258
    %v291 = vunpack.c.l.b16 %v259
    %v292 = vunpack.c.l.b16 %v260
    %v293 = vunpack.c.l.b16 %v261
    %v294 = vunpack.c.l.b16 %v262
    %v295 = vunpack.c.l.b16 %v263
    %v296 = vunpack.c.l.b16 %v264
    %v297 = vunpack.c.l.b16 %v265
    %v298 = vpack.c.b16 %v283, %v282
    %v299 = vpack.c.b16 %v285, %v284
    %v300 = vpack.c.b16 %v287, %v286
    %v301 = vpack.c.b16 %v289, %v288
    %v302 = vpack.c.b16 %v291, %v290
    %v303 = vpack.c.b16 %v293, %v292
    %v304 = vpack.c.b16 %v295, %v294
    %v305 = vpack.c.b16 %v297, %v296
    %314 = vmatpush.bf16.msra.mxu0 %v305
    %315 = vmatpush.bf16.msra.mxu0 %v304
    %316 = vmatpush.bf16.msra.mxu0 %v303
    %317 = vmatpush.bf16.msra.mxu0 %v302
    %318 = vmatpush.bf16.msra.mxu0 %v301
    %319 = vmatpush.bf16.msra.mxu0 %v300
    %320 = vmatpush.bf16.msra.mxu0 %v299
    %321 = vmatpush.bf16.msra.mxu0 %v298
    %322 = vmatmul.bf16.gmra.mxu0 %v249
    %v323 = vpop.f32.mrf.mxu0
    %v324 = vadd.f32 0.0, %v323
    %v325 = vpop.f32.mrf.mxu0
    %v326 = vadd.f32 0.0, %v325
    %327 = vdwg.mxu0
    %v328 = vpack.c.bf16 %v326, %v324
    %v329 = vld [vmem:[#allocation7] sm:$0xf]
    %v330 = vld [vmem:[#allocation7 + $0x4] sm:$0xf]
    %v331 = vld [vmem:[#allocation7 + $0x8] sm:$0xf]
    %v332 = vld [vmem:[#allocation7 + $0xc] sm:$0xf]
    %v333 = vld [vmem:[#allocation7 + $0x10] sm:$0xf]
    %v334 = vld [vmem:[#allocation7 + $0x14] sm:$0xf]
    %v335 = vld [vmem:[#allocation7 + $0x18] sm:$0xf]
    %v336 = vld [vmem:[#allocation7 + $0x1c] sm:$0xf]
    %v337 = vld [vmem:[#allocation7 + $0x20] sm:$0xf]
    %v338 = vld [vmem:[#allocation7 + $0x24] sm:$0xf]
    %v339 = vld [vmem:[#allocation7 + $0x28] sm:$0xf]
    %v340 = vld [vmem:[#allocation7 + $0x2c] sm:$0xf]
    %v341 = vld [vmem:[#allocation7 + $0x30] sm:$0xf]
    %v342 = vld [vmem:[#allocation7 + $0x34] sm:$0xf]
    %v343 = vld [vmem:[#allocation7 + $0x38] sm:$0xf]
    %v344 = vld [vmem:[#allocation7 + $0x3c] sm:$0xf]
    %v361 = vunpack.c.l.b16 %v329
    %v362 = vunpack.c.l.b16 %v330
    %v363 = vunpack.c.l.b16 %v331
    %v364 = vunpack.c.l.b16 %v332
    %v365 = vunpack.c.l.b16 %v333
    %v366 = vunpack.c.l.b16 %v334
    %v367 = vunpack.c.l.b16 %v335
    %v368 = vunpack.c.l.b16 %v336
    %v369 = vunpack.c.l.b16 %v337
    %v370 = vunpack.c.l.b16 %v338
    %v371 = vunpack.c.l.b16 %v339
    %v372 = vunpack.c.l.b16 %v340
    %v373 = vunpack.c.l.b16 %v341
    %v374 = vunpack.c.l.b16 %v342
    %v375 = vunpack.c.l.b16 %v343
    %v376 = vunpack.c.l.b16 %v344
    %v377 = vpack.c.b16 %v362, %v361
    %v378 = vpack.c.b16 %v364, %v363
    %v379 = vpack.c.b16 %v366, %v365
    %v380 = vpack.c.b16 %v368, %v367
    %v381 = vpack.c.b16 %v370, %v369
    %v382 = vpack.c.b16 %v372, %v371
    %v383 = vpack.c.b16 %v374, %v373
    %v384 = vpack.c.b16 %v376, %v375
    %393 = vmatpush.bf16.msra.mxu0 %v384
    %394 = vmatpush.bf16.msra.mxu0 %v383
    %395 = vmatpush.bf16.msra.mxu0 %v382
    %396 = vmatpush.bf16.msra.mxu0 %v381
    %397 = vmatpush.bf16.msra.mxu0 %v380
    %398 = vmatpush.bf16.msra.mxu0 %v379
    %399 = vmatpush.bf16.msra.mxu0 %v378
    %400 = vmatpush.bf16.msra.mxu0 %v377
    %401 = vmatmul.bf16.gmra.mxu0 %v328
    %v402 = vpop.f32.mrf.mxu0
    %v403 = vadd.f32 0.0, %v402
    %v404 = vpop.f32.mrf.mxu0
    %v405 = vadd.f32 0.0, %v404
    %406 = vdwg.mxu0
    %v407 = vmax.f32 %v403, 1e-30
    %v408 = vmax.f32 %v405, 1e-30
    %v409 = vrcp.pop %v407
    %v410 = vrcp.pop %v408
    %v411 = vmul.f32 %v246, %v409
    %v412 = vmul.f32 %v248, %v410
    %413 = vst [vmem:[%s9] sm:$0xff] %v411
    %414 = vst [vmem:[%s9 + $0x8] sm:$0xff] %v412
    // Predicated region
    $region54: #{_dqn_forward_impl.1} parent=1 // pred_check
      _
    $region55: #{_dqn_forward_impl.1} parent=1 // pred_check_branch
      %416 = sbr.rel (0) target = $region57
    $region56: #{_dqn_forward_impl.1} parent=1 // pred_region
      _
    $region57: #{_dqn_forward_impl.1} parent=1 // pred_fallthru
      _
    // Predicated region
    $region58: #{_dqn_forward_impl.1} parent=1 // pred_check
      _
    $region59: #{_dqn_forward_impl.1} parent=1 // pred_check_branch
      %418 = sbr.rel (0) target = $region61
    $region60: #{_dqn_forward_impl.1} parent=1 // pred_region
      _
    $region61: #{_dqn_forward_impl.1} parent=1 // pred_fallthru
      _
    %419 = vsyncpa [#allocation3], 1
    %420 = vsyncpa [#allocation5], 1
    %421 = vsyncpa [#allocation8], 1

</llo_original>
